<compile_context>
chip_gen: v6e
topology: v6e:2x2x1
jax: 0.10.0
libtpu: 0.0.40
codegen_flags: <defaults>
</compile_context>

<pallas_src>
import jax
import jax.numpy as jnp
import numpy as np
from jax.experimental import pallas as pl
from jax.experimental.pallas import tpu as pltpu


TN = 128  # lane tile (poses per grid step) for the batched kernel


# ----------------------- single-pose kernel (scalar) ----------------------- #
def _pose_matrix_scalar_kernel(se3_ref, out_ref):
    # se3_ref: SMEM (7,) f32, pypose order [tx,ty,tz,qx,qy,qz,qw]
    # out_ref: SMEM (16,) f32, row-major flattened 4x4 matrix
    tx = se3_ref[0]
    ty = se3_ref[1]
    tz = se3_ref[2]
    qx = se3_ref[3]
    qy = se3_ref[4]
    qz = se3_ref[5]
    qw = se3_ref[6]

    # TODO(synk): like pp.SE3.matrix(), this scalar path assumes a unit
    # quaternion (true at init via mat2SE3); if the learnable parameter drifts,
    # use _Pose.normalize() (pp.quat2unit) or the batched kernel below, which
    # renormalizes in-kernel.
    one = jnp.float32(1.0)
    two = jnp.float32(2.0)
    zero = jnp.float32(0.0)

    xx = qx * qx
    yy = qy * qy
    zz = qz * qz
    xy = qx * qy
    xz = qx * qz
    yz = qy * qz
    wx = qw * qx
    wy = qw * qy
    wz = qw * qz

    # Direct scalar stores: all work stays on the scalar ALU, no vregs touched.
    out_ref[0] = one - two * (yy + zz)
    out_ref[1] = two * (xy - wz)
    out_ref[2] = two * (xz + wy)
    out_ref[3] = tx
    out_ref[4] = two * (xy + wz)
    out_ref[5] = one - two * (xx + zz)
    out_ref[6] = two * (yz - wx)
    out_ref[7] = ty
    out_ref[8] = two * (xz - wy)
    out_ref[9] = two * (yz + wx)
    out_ref[10] = one - two * (xx + yy)
    out_ref[11] = tz
    out_ref[12] = zero
    out_ref[13] = zero
    out_ref[14] = zero
    out_ref[15] = one


def pose_forward(se3_param: jax.Array) -> jax.Array:
    """Pallas equivalent of _Pose.forward(): SE3 7-vector -> (4, 4) matrix."""
    flat = pl.pallas_call(
        _pose_matrix_scalar_kernel,
        out_shape=jax.ShapeDtypeStruct((16,), jnp.float32),
        in_specs=[pl.BlockSpec(memory_space=pltpu.MemorySpace.SMEM)],
        out_specs=pl.BlockSpec(memory_space=pltpu.MemorySpace.SMEM),
    )(se3_param.astype(jnp.float32))
    return flat.reshape(4, 4)


# ---------------------- batched kernel (lane-parallel) --------------------- #
def _pose_matrix_batched_kernel(p_ref, out_ref):
    # p_ref:  VMEM (7, TN)  — rows [tx,ty,tz,qx,qy,qz,qw], poses on lanes
    # out_ref: VMEM (16, TN) — row-major flattened 4x4 per pose (lane-dense)
    tx = p_ref[0:1, :]
    ty = p_ref[1:2, :]
    tz = p_ref[2:3, :]
    qx = p_ref[3:4, :]
    qy = p_ref[4:5, :]
    qz = p_ref[5:6, :]
    qw = p_ref[6:7, :]

    # Rotation-matrix entries are quadratic in q, so scaling by s = 2/|q|^2
    # renormalizes exactly without any sqrt (s == 2 for unit quaternions).
    n = qx * qx + qy * qy + qz * qz + qw * qw
    s = jnp.float32(2.0) / n

    xx = qx * qx
    yy = qy * qy
    zz = qz * qz
    xy = qx * qy
    xz = qx * qz
    yz = qy * qz
    wx = qw * qx
    wy = qw * qy
    wz = qw * qz

    one = jnp.ones_like(tx)
    zero = jnp.zeros_like(tx)

    r00 = one - s * (yy + zz)
    r01 = s * (xy - wz)
    r02 = s * (xz + wy)
    r10 = s * (xy + wz)
    r11 = one - s * (xx + zz)
    r12 = s * (yz - wx)
    r20 = s * (xz - wy)
    r21 = s * (yz + wx)
    r22 = one - s * (xx + yy)

    out_ref[...] = jnp.concatenate(
        [r00, r01, r02, tx,
         r10, r11, r12, ty,
         r20, r21, r22, tz,
         zero, zero, zero, one],
        axis=0,
    )


def pose_forward_batched(se3_params: jax.Array) -> jax.Array:
    """(N, 7) SE3 parameters -> (N, 4, 4) homogeneous matrices, one pallas_call."""
    se3_params = se3_params.astype(jnp.float32)
    n = se3_params.shape[0]
    n_pad = pl.cdiv(n, TN) * TN
    if n_pad != n:
        ident = jnp.array([0, 0, 0, 0, 0, 0, 1], dtype=jnp.float32)
        pad = jnp.tile(ident[None, :], (n_pad - n, 1))
        se3_params = jnp.concatenate([se3_params, pad], axis=0)

    # Lane-major layout: pose components on sublanes, poses on the lane axis.
    p = se3_params.T  # (7, n_pad)

    out = pl.pallas_call(
        _pose_matrix_batched_kernel,
        out_shape=jax.ShapeDtypeStruct((16, n_pad), jnp.float32),
        grid=(n_pad // TN,),
        in_specs=[pl.BlockSpec((7, TN), lambda i: (0, i))],
        out_specs=pl.BlockSpec((16, TN), lambda i: (0, i)),
        compiler_params=pltpu.CompilerParams(
            dimension_semantics=("parallel",)),
    )(p)
    return out[:, :n].T.reshape(n, 4, 4)


# ------------------- parameter setup glue (pp.mat2SE3) -------------------- #
def _sqrt_positive_part(x):
    return jnp.where(x > 0, jnp.sqrt(jnp.maximum(x, 0.0)), jnp.zeros_like(x))


def _matrix_to_quaternion_wxyz(R):
    """JAX mirror of matrix_to_quaternion (real part first), for param init."""
    m00, m01, m02 = R[0, 0], R[0, 1], R[0, 2]
    m10, m11, m12 = R[1, 0], R[1, 1], R[1, 2]
    m20, m21, m22 = R[2, 0], R[2, 1], R[2, 2]
    q_abs = _sqrt_positive_part(
        jnp.stack([
            1.0 + m00 + m11 + m22,
            1.0 + m00 - m11 - m22,
            1.0 - m00 + m11 - m22,
            1.0 - m00 - m11 + m22,
        ])
    )
    quat_by_rijk = jnp.stack([
        jnp.stack([q_abs[0] ** 2, m21 - m12, m02 - m20, m10 - m01]),
        jnp.stack([m21 - m12, q_abs[1] ** 2, m10 + m01, m02 + m20]),
        jnp.stack([m02 - m20, m10 + m01, q_abs[2] ** 2, m12 + m21]),
        jnp.stack([m10 - m01, m20 + m02, m21 + m12, q_abs[3] ** 2]),
    ])
    quat_candidates = quat_by_rijk / (2.0 * jnp.maximum(q_abs[:, None], 0.1))
    out = quat_candidates[jnp.argmax(q_abs)]
    # standardize_quaternion: non-negative real part
    return jnp.where(out[0] < 0, -out, out)


def mat2se3_param(Rt_4x4: jax.Array) -> jax.Array:
    """pp.mat2SE3(Rt[:3,:]) equivalent: -> [tx,ty,tz,qx,qy,qz,qw] float32."""
    R = Rt_4x4[:3, :3]
    t = Rt_4x4[:3, 3]
    q_wxyz = _matrix_to_quaternion_wxyz(R)
    q_xyzw = jnp.stack([q_wxyz[1], q_wxyz[2], q_wxyz[3], q_wxyz[0]])
    return jnp.concatenate([t, q_xyzw]).astype(jnp.float32)


# TODO(synk): pp.Parameter learnability, _Pose.normalize() (pp.quat2unit),
# to_qt() and __deepcopy__ are not part of forward(); only forward()
# (Rt.matrix()) is implemented as a kernel.


# --------------------------------- main ------------------------------------ #
if __name__ == "__main__":
    key = jax.random.PRNGKey(0)
    k_axis, k_trans, k_baxis, k_bang, k_btrans = jax.random.split(key, 5)

    def rodrigues_Rt(axis, angle, trans):
        axis = axis / jnp.linalg.norm(axis)
        K = jnp.array(
            [[0.0, -axis[2], axis[1]],
             [axis[2], 0.0, -axis[0]],
             [-axis[1], axis[0], 0.0]],
            dtype=jnp.float32,
        )
        R = (jnp.eye(3, dtype=jnp.float32) + jnp.sin(angle) * K
             + (1.0 - jnp.cos(angle)) * (K @ K))
        Rt = jnp.eye(4, dtype=jnp.float32)
        Rt = Rt.at[:3, :3].set(R)
        Rt = Rt.at[:3, 3].set(trans)
        return Rt

    # ---- single pose: exact _Pose.forward() semantics ----
    axis = jax.random.normal(k_axis, (3,), dtype=jnp.float32)
    t = jax.random.normal(k_trans, (3,), dtype=jnp.float32)
    Rt = rodrigues_Rt(axis, jnp.float32(0.7), t)

    se3_param = mat2se3_param(Rt)               # __init__ glue: 4x4 -> 7-vector
    out = jax.block_until_ready(pose_forward(se3_param))
    np.testing.assert_allclose(np.asarray(out), np.asarray(Rt),
                               atol=1e-5, rtol=1e-5)
    assert out.shape == (4, 4) and out.dtype == jnp.float32

    # ---- batched poses: amortized launch, lane-dense layout ----
    N = 256
    axes = jax.random.normal(k_baxis, (N, 3), dtype=jnp.float32)
    angles = jax.random.uniform(k_bang, (N,), dtype=jnp.float32,
                                minval=0.1, maxval=2.5)
    trans = jax.random.normal(k_btrans, (N, 3), dtype=jnp.float32)
    Rt_batch = jax.vmap(rodrigues_Rt)(axes, angles, trans)        # (N, 4, 4)
    se3_batch = jax.vmap(mat2se3_param)(Rt_batch)                 # (N, 7)

    out_batch = jax.block_until_ready(pose_forward_batched(se3_batch))
    np.testing.assert_allclose(np.asarray(out_batch), np.asarray(Rt_batch),
                               atol=2e-5, rtol=2e-5)
    assert out_batch.shape == (N, 4, 4) and out_batch.dtype == jnp.float32

    print("KERNEL_OK")
</pallas_src>

<mosaic_0001>
module attributes {stable_mosaic.version = 11 : i64} {
  func.func @_pose_matrix_scalar_kernel(%arg0: memref<7xf32, #tpu.memory_space<smem>>, %arg1: memref<16xf32, #tpu.memory_space<smem>>) attributes {dimension_semantics = [], scalar_prefetch = 0 : i64, scratch_operands = 0 : i64, tpu.core_type = #tpu.core_type<tc>} {
    %c0 = arith.constant 0 : index
    %0 = memref.load %arg0[%c0] : memref<7xf32, #tpu.memory_space<smem>>
    %c1 = arith.constant 1 : index
    %1 = memref.load %arg0[%c1] : memref<7xf32, #tpu.memory_space<smem>>
    %c2 = arith.constant 2 : index
    %2 = memref.load %arg0[%c2] : memref<7xf32, #tpu.memory_space<smem>>
    %c3 = arith.constant 3 : index
    %3 = memref.load %arg0[%c3] : memref<7xf32, #tpu.memory_space<smem>>
    %c4 = arith.constant 4 : index
    %4 = memref.load %arg0[%c4] : memref<7xf32, #tpu.memory_space<smem>>
    %c5 = arith.constant 5 : index
    %5 = memref.load %arg0[%c5] : memref<7xf32, #tpu.memory_space<smem>>
    %c6 = arith.constant 6 : index
    %6 = memref.load %arg0[%c6] : memref<7xf32, #tpu.memory_space<smem>>
    %7 = arith.mulf %3, %3 : f32
    %8 = arith.mulf %4, %4 : f32
    %9 = arith.mulf %5, %5 : f32
    %10 = arith.mulf %3, %4 : f32
    %11 = arith.mulf %3, %5 : f32
    %12 = arith.mulf %4, %5 : f32
    %13 = arith.mulf %6, %3 : f32
    %14 = arith.mulf %6, %4 : f32
    %15 = arith.mulf %6, %5 : f32
    %16 = arith.addf %8, %9 : f32
    %cst = arith.constant 2.000000e+00 : f32
    %17 = arith.mulf %cst, %16 : f32
    %cst_0 = arith.constant 1.000000e+00 : f32
    %18 = arith.subf %cst_0, %17 : f32
    %c0_1 = arith.constant 0 : index
    %19 = memref.load %arg1[%c0_1] : memref<16xf32, #tpu.memory_space<smem>>
    memref.store %18, %arg1[%c0_1] : memref<16xf32, #tpu.memory_space<smem>>
    %20 = arith.subf %10, %15 : f32
    %cst_2 = arith.constant 2.000000e+00 : f32
    %21 = arith.mulf %cst_2, %20 : f32
    %c1_3 = arith.constant 1 : index
    %22 = memref.load %arg1[%c1_3] : memref<16xf32, #tpu.memory_space<smem>>
    memref.store %21, %arg1[%c1_3] : memref<16xf32, #tpu.memory_space<smem>>
    %23 = arith.addf %11, %14 : f32
    %cst_4 = arith.constant 2.000000e+00 : f32
    %24 = arith.mulf %cst_4, %23 : f32
    %c2_5 = arith.constant 2 : index
    %25 = memref.load %arg1[%c2_5] : memref<16xf32, #tpu.memory_space<smem>>
    memref.store %24, %arg1[%c2_5] : memref<16xf32, #tpu.memory_space<smem>>
    %c3_6 = arith.constant 3 : index
    %26 = memref.load %arg1[%c3_6] : memref<16xf32, #tpu.memory_space<smem>>
    memref.store %0, %arg1[%c3_6] : memref<16xf32, #tpu.memory_space<smem>>
    %27 = arith.addf %10, %15 : f32
    %cst_7 = arith.constant 2.000000e+00 : f32
    %28 = arith.mulf %cst_7, %27 : f32
    %c4_8 = arith.constant 4 : index
    %29 = memref.load %arg1[%c4_8] : memref<16xf32, #tpu.memory_space<smem>>
    memref.store %28, %arg1[%c4_8] : memref<16xf32, #tpu.memory_space<smem>>
    %30 = arith.addf %7, %9 : f32
    %cst_9 = arith.constant 2.000000e+00 : f32
    %31 = arith.mulf %cst_9, %30 : f32
    %cst_10 = arith.constant 1.000000e+00 : f32
    %32 = arith.subf %cst_10, %31 : f32
    %c5_11 = arith.constant 5 : index
    %33 = memref.load %arg1[%c5_11] : memref<16xf32, #tpu.memory_space<smem>>
    memref.store %32, %arg1[%c5_11] : memref<16xf32, #tpu.memory_space<smem>>
    %34 = arith.subf %12, %13 : f32
    %cst_12 = arith.constant 2.000000e+00 : f32
    %35 = arith.mulf %cst_12, %34 : f32
    %c6_13 = arith.constant 6 : index
    %36 = memref.load %arg1[%c6_13] : memref<16xf32, #tpu.memory_space<smem>>
    memref.store %35, %arg1[%c6_13] : memref<16xf32, #tpu.memory_space<smem>>
    %c7 = arith.constant 7 : index
    %37 = memref.load %arg1[%c7] : memref<16xf32, #tpu.memory_space<smem>>
    memref.store %1, %arg1[%c7] : memref<16xf32, #tpu.memory_space<smem>>
    %38 = arith.subf %11, %14 : f32
    %cst_14 = arith.constant 2.000000e+00 : f32
    %39 = arith.mulf %cst_14, %38 : f32
    %c8 = arith.constant 8 : index
    %40 = memref.load %arg1[%c8] : memref<16xf32, #tpu.memory_space<smem>>
    memref.store %39, %arg1[%c8] : memref<16xf32, #tpu.memory_space<smem>>
    %41 = arith.addf %12, %13 : f32
    %cst_15 = arith.constant 2.000000e+00 : f32
    %42 = arith.mulf %cst_15, %41 : f32
    %c9 = arith.constant 9 : index
    %43 = memref.load %arg1[%c9] : memref<16xf32, #tpu.memory_space<smem>>
    memref.store %42, %arg1[%c9] : memref<16xf32, #tpu.memory_space<smem>>
    %44 = arith.addf %7, %8 : f32
    %cst_16 = arith.constant 2.000000e+00 : f32
    %45 = arith.mulf %cst_16, %44 : f32
    %cst_17 = arith.constant 1.000000e+00 : f32
    %46 = arith.subf %cst_17, %45 : f32
    %c10 = arith.constant 10 : index
    %47 = memref.load %arg1[%c10] : memref<16xf32, #tpu.memory_space<smem>>
    memref.store %46, %arg1[%c10] : memref<16xf32, #tpu.memory_space<smem>>
    %c11 = arith.constant 11 : index
    %48 = memref.load %arg1[%c11] : memref<16xf32, #tpu.memory_space<smem>>
    memref.store %2, %arg1[%c11] : memref<16xf32, #tpu.memory_space<smem>>
    %cst_18 = arith.constant 0.000000e+00 : f32
    %c12 = arith.constant 12 : index
    %49 = memref.load %arg1[%c12] : memref<16xf32, #tpu.memory_space<smem>>
    memref.store %cst_18, %arg1[%c12] : memref<16xf32, #tpu.memory_space<smem>>
    %cst_19 = arith.constant 0.000000e+00 : f32
    %c13 = arith.constant 13 : index
    %50 = memref.load %arg1[%c13] : memref<16xf32, #tpu.memory_space<smem>>
    memref.store %cst_19, %arg1[%c13] : memref<16xf32, #tpu.memory_space<smem>>
    %cst_20 = arith.constant 0.000000e+00 : f32
    %c14 = arith.constant 14 : index
    %51 = memref.load %arg1[%c14] : memref<16xf32, #tpu.memory_space<smem>>
    memref.store %cst_20, %arg1[%c14] : memref<16xf32, #tpu.memory_space<smem>>
    %cst_21 = arith.constant 1.000000e+00 : f32
    %c15 = arith.constant 15 : index
    %52 = memref.load %arg1[%c15] : memref<16xf32, #tpu.memory_space<smem>>
    memref.store %cst_21, %arg1[%c15] : memref<16xf32, #tpu.memory_space<smem>>
    return
  }
}

</mosaic_0001>

<llo_original>
// kernel: tpu_custom_call.1
$region0: #{tpu_custom_call.1}
  #allocation0 [shape = 'u32[]', space=smem, size = 0x4, offset = 0x4, fixed_abs, tag = 'smem constant byte address 0x4 - core index']
  #allocation1 [shape = 'u32[144,128]{1,0:T(1,128)}', space=vmem, size = 0x12000, scoped, tag = 'internal scratch']
  %s0 = inlined_call_operand.hbm [shape: f32[7], index: 0, kind: input, shape index: {}]
  %s1 = inlined_call_operand.hbm [shape: f32[16], index: 1, kind: output, shape index: {}]
  %s2 = sld [smem:[#allocation0]]
  $region18: #{tpu_custom_call.1} parent=0
    _
  %s4 = ssub.s32 1, %s2
  %s5 = scalar_select 0, %s4, %s2
  $region1: #{tpu_custom_call.1} parent=0
    #allocation2 [shape = 'u8[512]{0}', space=smem, size = 0x200, scoped, tag = 'input window, operand 0, single buffered']
    #allocation3 [shape = 's32[1]{0}', space=sflag, size = 0x4, scoped, tag = 'scoped memory for tpu_custom_call.1']
    #allocation4 [shape = 's32[1]{0}', space=sflag, size = 0x4, scoped, tag = 'scoped memory for tpu_custom_call.1']
    #allocation5 [shape = 'u8[512]{0}', space=smem, size = 0x200, scoped, tag = 'output window, operand 0, single buffered']
    %6 = vsyncpa [#allocation3], 0
    %7 = vsyncpa [#allocation4], 0
    // Predicated region
    $region2: #{tpu_custom_call.1} parent=1 // pred_check
      _
    $region3: #{tpu_custom_call.1} parent=1 // pred_check_branch
      %9 = sbr.rel (0) target = $region5
    $region4: #{tpu_custom_call.1} parent=1 // pred_region
      %s11 = ssub.s32 16, 16
      %12 = vsyncadd [#allocation3], %s11
      %15 = dma.hbm_to_smem %s0, 16, [#allocation2], [#allocation3]
    $region5: #{tpu_custom_call.1} parent=1 // pred_fallthru
      _
    // Predicated region
    $region6: #{tpu_custom_call.1} parent=1 // pred_check
      _
    $region7: #{tpu_custom_call.1} parent=1 // pred_check_branch
      %17 = sbr.rel (0) target = $region9
    $region8: #{tpu_custom_call.1} parent=1 // pred_region
      %18 = dma.done [#allocation3], 16
    $region9: #{tpu_custom_call.1} parent=1 // pred_fallthru
      _
    %19 = sfence
    %s20 = sld [smem:[#allocation2]]
    %s21 = sld [smem:[#allocation2 + $0x1]]
    %s22 = sld [smem:[#allocation2 + $0x2]]
    %s23 = sld [smem:[#allocation2 + $0x3]]
    %s24 = sld [smem:[#allocation2 + $0x4]]
    %s25 = sld [smem:[#allocation2 + $0x5]]
    %s26 = sld [smem:[#allocation2 + $0x6]]
    %s27 = smul.f32 %s23, %s23
    %s28 = smul.f32 %s24, %s24
    %s29 = smul.f32 %s25, %s25
    %s30 = smul.f32 %s23, %s24
    %s31 = smul.f32 %s23, %s25
    %s32 = smul.f32 %s24, %s25
    %s33 = smul.f32 %s26, %s23
    %s34 = smul.f32 %s26, %s24
    %s35 = smul.f32 %s26, %s25
    %s36 = sadd.f32 %s28, %s29
    %s37 = smul.f32 %s36, 2.0
    %s38 = ssub.f32 1.0, %s37
    %s39 = scalar_lea.smem [#allocation5], 0
    %40 = sst [smem:[%s39]] %s38
    %s41 = ssub.f32 %s30, %s35
    %s42 = smul.f32 %s41, 2.0
    %s43 = scalar_lea.smem [#allocation5], 1
    %44 = sst [smem:[%s43]] %s42
    %s45 = sadd.f32 %s31, %s34
    %s46 = smul.f32 %s45, 2.0
    %s47 = scalar_lea.smem [#allocation5], 2
    %48 = sst [smem:[%s47]] %s46
    %s49 = scalar_lea.smem [#allocation5], 3
    %50 = sst [smem:[%s49]] %s20
    %s51 = sadd.f32 %s30, %s35
    %s52 = smul.f32 %s51, 2.0
    %s53 = scalar_lea.smem [#allocation5], 4
    %54 = sst [smem:[%s53]] %s52
    %s55 = sadd.f32 %s27, %s29
    %s56 = smul.f32 %s55, 2.0
    %s57 = ssub.f32 1.0, %s56
    %s58 = scalar_lea.smem [#allocation5], 5
    %59 = sst [smem:[%s58]] %s57
    %s60 = ssub.f32 %s32, %s33
    %s61 = smul.f32 %s60, 2.0
    %s62 = scalar_lea.smem [#allocation5], 6
    %63 = sst [smem:[%s62]] %s61
    %s64 = scalar_lea.smem [#allocation5], 7
    %65 = sst [smem:[%s64]] %s21
    %s66 = ssub.f32 %s31, %s34
    %s67 = smul.f32 %s66, 2.0
    %s68 = scalar_lea.smem [#allocation5], 8
    %69 = sst [smem:[%s68]] %s67
    %s70 = sadd.f32 %s32, %s33
    %s71 = smul.f32 %s70, 2.0
    %s72 = scalar_lea.smem [#allocation5], 9
    %73 = sst [smem:[%s72]] %s71
    %s74 = sadd.f32 %s27, %s28
    %s75 = smul.f32 %s74, 2.0
    %s76 = ssub.f32 1.0, %s75
    %s77 = scalar_lea.smem [#allocation5], 10
    %78 = sst [smem:[%s77]] %s76
    %s79 = scalar_lea.smem [#allocation5], 11
    %80 = sst [smem:[%s79]] %s22
    %s81 = scalar_lea.smem [#allocation5], 12
    %82 = sst [smem:[%s81]] 0.0
    %s83 = scalar_lea.smem [#allocation5], 13
    %84 = sst [smem:[%s83]] 0.0
    %s85 = scalar_lea.smem [#allocation5], 14
    %86 = sst [smem:[%s85]] 0.0
    %s87 = scalar_lea.smem [#allocation5], 15
    %88 = sst [smem:[%s87]] 1.0
    // Predicated region
    $region10: #{tpu_custom_call.1} parent=1 // pred_check
      _
    $region11: #{tpu_custom_call.1} parent=1 // pred_check_branch
      %90 = sbr.rel (0) target = $region13
    $region12: #{tpu_custom_call.1} parent=1 // pred_region
      %s92 = ssub.s32 16, 16
      %93 = vsyncadd [#allocation4], %s92
      %96 = dma.smem_to_hbm [#allocation5], 16, %s1, [#allocation4]
    $region13: #{tpu_custom_call.1} parent=1 // pred_fallthru
      _
    // Predicated region
    $region14: #{tpu_custom_call.1} parent=1 // pred_check
      _
    $region15: #{tpu_custom_call.1} parent=1 // pred_check_branch
      %98 = sbr.rel (0) target = $region17
    $region16: #{tpu_custom_call.1} parent=1 // pred_region
      %99 = dma.done [#allocation4], 16
    $region17: #{tpu_custom_call.1} parent=1 // pred_fallthru
      _
    %100 = sfence
    %101 = vsyncpa [#allocation3], 1
    %102 = vsyncpa [#allocation4], 1

</llo_original>
